<compile_context>
chip_gen: v6e
topology: v6e:2x2x1
jax: 0.10.0
libtpu: 0.0.40
codegen_flags: <defaults>
</compile_context>

<pallas_src>
import numpy as np
import jax
import jax.numpy as jnp
from jax.experimental import pallas as pl
from jax.experimental.pallas import tpu as pltpu


# -----------------------------------------------------------------------------
# Single fused kernel: bulk input projection + unrolled LSTM recurrence +
# temporal mean + split-matmul classification head + ReLU.  Everything is
# VMEM/vreg-resident; no grid, no scratch, no pipelining.
# -----------------------------------------------------------------------------
def fused_lstm_head_kernel(x_ref, w_ih_ref, w_hh_ref, b_ref,
                           feat_ref, w_comb_ref, wfc_h_ref, b_comb_ref,
                           out_ref):
    SB, _E = x_ref.shape           # (S*B, E) seq-major, flattened
    H = w_hh_ref.shape[0]          # hidden size
    B = feat_ref.shape[0]          # batch
    S = SB // B                    # static seq length

    # --- Bulk input projection (one MXU push for the whole sequence) -------
    xw_all = (jnp.dot(x_ref[...], w_ih_ref[...],
                      preferred_element_type=jnp.float32)
              + b_ref[...])                                      # (S*B, 4H)

    w_hh = w_hh_ref[...]           # (H, 4H) resident in vregs

    h = jnp.zeros((B, H), jnp.float32)
    c = jnp.zeros((B, H), jnp.float32)
    h_sum = jnp.zeros((B, H), jnp.float32)

    # S is a small compile-time constant -> fully unrolled straight-line code.
    for t in range(S):
        xw_t = xw_all[t * B:(t + 1) * B, :]                      # (B, 4H) static slice
        # Keep the add adjacent to the dot (MRB accumulate on v7x).
        gates = jnp.dot(h, w_hh, preferred_element_type=jnp.float32) + xw_t

        sg = jax.nn.sigmoid(gates)        # 1 EUP push for i/f/o
        tg = jnp.tanh(gates)              # 1 EUP push for g
        i_g = sg[:, 0 * H:1 * H]
        f_g = sg[:, 1 * H:2 * H]
        g_g = tg[:, 2 * H:3 * H]
        o_g = sg[:, 3 * H:4 * H]

        c = f_g * c + i_g * g_g
        h = o_g * jnp.tanh(c)             # 1 EUP push
        h_sum = h_sum + h

    h_mean = h_sum * (1.0 / S)                                   # (B, H)

    # Head: split matmul (concat folded), feature FC algebraically pre-folded.
    logits = (jnp.dot(h_mean, wfc_h_ref[...], preferred_element_type=jnp.float32)
              + jnp.dot(feat_ref[...], w_comb_ref[...],
                        preferred_element_type=jnp.float32)
              + b_comb_ref[...])                                 # (B, L)
    out_ref[...] = jnp.maximum(logits, 0.0)


def test_model_forward(params, inputs, feature):
    """inputs: (batch, seq, embed) batch-major; feature: (batch, 100)."""
    B, S, E = inputs.shape
    L = params["b_comb"].shape[1]

    # Seq-major, flattened to (S*B, E) so per-step data is a leading-axis
    # slice of the in-kernel bulk projection.  Tiny array -> free in XLA.
    x_sm = jnp.transpose(inputs, (1, 0, 2)).reshape(S * B, E)

    vmem = pl.BlockSpec(memory_space=pltpu.MemorySpace.VMEM)
    return pl.pallas_call(
        fused_lstm_head_kernel,
        out_shape=jax.ShapeDtypeStruct((B, L), jnp.float32),
        in_specs=[vmem] * 8,
        out_specs=vmem,
    )(x_sm, params["w_ih_t"], params["w_hh_t"], params["b_lstm"],
      feature, params["w_comb"], params["wfc_h_t"], params["b_comb"])


# -----------------------------------------------------------------------------
# Pure-JAX reference (lax.scan LSTM) for a correctness check.
# -----------------------------------------------------------------------------
def ref_forward(raw, inputs, feature):
    x = jnp.transpose(inputs, (1, 0, 2))
    H = raw["whh"].shape[1]
    B = x.shape[1]

    def step(carry, x_t):
        h, c = carry
        gates = x_t @ raw["wih"].T + h @ raw["whh"].T + raw["bih"] + raw["bhh"]
        i = jax.nn.sigmoid(gates[:, :H])
        f = jax.nn.sigmoid(gates[:, H:2 * H])
        g = jnp.tanh(gates[:, 2 * H:3 * H])
        o = jax.nn.sigmoid(gates[:, 3 * H:])
        c = f * c + i * g
        h = o * jnp.tanh(c)
        return (h, c), h

    _, hs = jax.lax.scan(step, (jnp.zeros((B, H)), jnp.zeros((B, H))), x)
    h_mean = jnp.mean(hs, axis=0)
    zip_f = feature @ raw["wf"].T + raw["bf"]
    cat = jnp.concatenate([h_mean, zip_f], axis=1)
    return jax.nn.relu(cat @ raw["wfc"].T + raw["bfc"])


if __name__ == "__main__":
    # args: embedding_dim=16, hidden_size=32, num_layers=1, dropout=0.0,
    #       bidirectional=False, feature_size=16, label_nums=8
    B, S, E, H = 4, 8, 16, 32
    FEAT_IN, F, L = 100, 16, 8

    key = jax.random.PRNGKey(0)
    ks = jax.random.split(key, 10)

    # PyTorch-shaped raw parameters (deterministic synthetic init).
    raw = {
        "wih": 0.1 * jax.random.normal(ks[0], (4 * H, E), jnp.float32),
        "whh": 0.1 * jax.random.normal(ks[1], (4 * H, H), jnp.float32),
        "bih": 0.1 * jax.random.normal(ks[2], (4 * H,), jnp.float32),
        "bhh": 0.1 * jax.random.normal(ks[3], (4 * H,), jnp.float32),
        "wf":  0.1 * jax.random.normal(ks[4], (F, FEAT_IN), jnp.float32),
        "bf":  0.1 * jax.random.normal(ks[5], (F,), jnp.float32),
        "wfc": 0.1 * jax.random.normal(ks[6], (L, H + F), jnp.float32),
        "bfc": 0.1 * jax.random.normal(ks[7], (L,), jnp.float32),
    }

    # Kernel-friendly packing (done once, outside the hot path):
    #   * transposed LSTM weights kept SEPARATE (W_ih^T for the bulk matmul,
    #     W_hh^T for the recurrence), pre-summed bias,
    #   * fc weight split along its input dim (concat folded),
    #   * featurefc folded into the feature half of fc:
    #       W_comb = Wf^T @ Wfc_f^T,  b_comb = bfc + bf @ Wfc_f^T.
    wfc_h = raw["wfc"][:, :H]            # (L, H)
    wfc_f = raw["wfc"][:, H:]            # (L, F)
    params = {
        "w_ih_t":  raw["wih"].T,                                   # (E, 4H)
        "w_hh_t":  raw["whh"].T,                                   # (H, 4H)
        "b_lstm":  (raw["bih"] + raw["bhh"])[None, :],             # (1, 4H)
        "wfc_h_t": wfc_h.T,                                        # (H, L)
        "w_comb":  raw["wf"].T @ wfc_f.T,                          # (100, L)
        "b_comb":  (raw["bfc"] + raw["bf"] @ wfc_f.T)[None, :],    # (1, L)
    }

    inputs = jax.random.normal(ks[8], (B, S, E), jnp.float32)      # (batch, seq, embed)
    feature = jax.random.normal(ks[9], (B, FEAT_IN), jnp.float32)  # (batch, 100)

    out = test_model_forward(params, inputs, feature)
    out = jax.block_until_ready(out)

    ref = jax.block_until_ready(ref_forward(raw, inputs, feature))
    np.testing.assert_allclose(np.asarray(out), np.asarray(ref), atol=2e-3, rtol=2e-3)

    print("KERNEL_OK")
</pallas_src>

<mosaic_0001>
module attributes {stable_mosaic.version = 11 : i64} {
  func.func @fused_lstm_head_kernel(%arg0: memref<32x16xf32, #tpu.memory_space<vmem>>, %arg1: memref<16x128xf32, #tpu.memory_space<vmem>>, %arg2: memref<32x128xf32, #tpu.memory_space<vmem>>, %arg3: memref<1x128xf32, #tpu.memory_space<vmem>>, %arg4: memref<4x100xf32, #tpu.memory_space<vmem>>, %arg5: memref<100x8xf32, #tpu.memory_space<vmem>>, %arg6: memref<32x8xf32, #tpu.memory_space<vmem>>, %arg7: memref<1x8xf32, #tpu.memory_space<vmem>>, %arg8: memref<4x8xf32, #tpu.memory_space<vmem>>) attributes {dimension_semantics = [], scalar_prefetch = 0 : i64, scratch_operands = 0 : i64, tpu.core_type = #tpu.core_type<tc>} {
    %c0 = arith.constant 0 : index
    %c0_0 = arith.constant 0 : index
    %0 = vector.load %arg0[%c0, %c0_0] : memref<32x16xf32, #tpu.memory_space<vmem>>, vector<32x16xf32>
    %c0_1 = arith.constant 0 : index
    %c0_2 = arith.constant 0 : index
    %1 = vector.load %arg1[%c0_1, %c0_2] : memref<16x128xf32, #tpu.memory_space<vmem>>, vector<16x128xf32>
    %cst = arith.constant dense<0.000000e+00> : vector<32x128xf32>
    %2 = tpu.matmul %0, %1, %cst {dimension_numbers = #tpu.dot_dimension_numbers<[1], [0], [0], [1], [0, 0, 1, 1], [], []>} : vector<32x16xf32>, vector<16x128xf32>, vector<32x128xf32> -> vector<32x128xf32>
    %c0_3 = arith.constant 0 : index
    %c0_4 = arith.constant 0 : index
    %3 = vector.load %arg3[%c0_3, %c0_4] : memref<1x128xf32, #tpu.memory_space<vmem>>, vector<1x128xf32>
    %4 = vector.broadcast %3 : vector<1x128xf32> to vector<32x128xf32>
    %5 = arith.addf %2, %4 : vector<32x128xf32>
    %c0_5 = arith.constant 0 : index
    %c0_6 = arith.constant 0 : index
    %6 = vector.load %arg2[%c0_5, %c0_6] : memref<32x128xf32, #tpu.memory_space<vmem>>, vector<32x128xf32>
    %cst_7 = arith.constant 0.000000e+00 : f32
    %7 = vector.broadcast %cst_7 : f32 to vector<4x32xf32>
    %cst_8 = arith.constant 0.000000e+00 : f32
    %8 = vector.broadcast %cst_8 : f32 to vector<4x32xf32>
    %cst_9 = arith.constant 0.000000e+00 : f32
    %9 = vector.broadcast %cst_9 : f32 to vector<4x32xf32>
    %10 = vector.extract_strided_slice %5 {offsets = [0, 0], sizes = [4, 128], strides = [1, 1]} : vector<32x128xf32> to vector<4x128xf32>
    %cst_10 = arith.constant dense<0.000000e+00> : vector<4x128xf32>
    %11 = tpu.matmul %7, %6, %cst_10 {dimension_numbers = #tpu.dot_dimension_numbers<[1], [0], [0], [1], [0, 0, 1, 1], [], []>} : vector<4x32xf32>, vector<32x128xf32>, vector<4x128xf32> -> vector<4x128xf32>
    %12 = arith.addf %11, %10 : vector<4x128xf32>
    %13 = arith.negf %12 : vector<4x128xf32>
    %14 = math.exp %13 : vector<4x128xf32>
    %cst_11 = arith.constant 1.000000e+00 : f32
    %15 = vector.broadcast %cst_11 : f32 to vector<4x128xf32>
    %16 = arith.addf %15, %14 : vector<4x128xf32>
    %17 = arith.divf %15, %16 : vector<4x128xf32>
    %18 = math.tanh %12 : vector<4x128xf32>
    %19 = vector.extract_strided_slice %17 {offsets = [0, 0], sizes = [4, 32], strides = [1, 1]} : vector<4x128xf32> to vector<4x32xf32>
    %20 = vector.extract_strided_slice %17 {offsets = [0, 32], sizes = [4, 32], strides = [1, 1]} : vector<4x128xf32> to vector<4x32xf32>
    %21 = vector.extract_strided_slice %18 {offsets = [0, 64], sizes = [4, 32], strides = [1, 1]} : vector<4x128xf32> to vector<4x32xf32>
    %22 = vector.extract_strided_slice %17 {offsets = [0, 96], sizes = [4, 32], strides = [1, 1]} : vector<4x128xf32> to vector<4x32xf32>
    %23 = arith.mulf %20, %8 : vector<4x32xf32>
    %24 = arith.mulf %19, %21 : vector<4x32xf32>
    %25 = arith.addf %23, %24 : vector<4x32xf32>
    %26 = math.tanh %25 : vector<4x32xf32>
    %27 = arith.mulf %22, %26 : vector<4x32xf32>
    %28 = arith.addf %9, %27 : vector<4x32xf32>
    %29 = vector.extract_strided_slice %5 {offsets = [4, 0], sizes = [4, 128], strides = [1, 1]} : vector<32x128xf32> to vector<4x128xf32>
    %cst_12 = arith.constant dense<0.000000e+00> : vector<4x128xf32>
    %30 = tpu.matmul %27, %6, %cst_12 {dimension_numbers = #tpu.dot_dimension_numbers<[1], [0], [0], [1], [0, 0, 1, 1], [], []>} : vector<4x32xf32>, vector<32x128xf32>, vector<4x128xf32> -> vector<4x128xf32>
    %31 = arith.addf %30, %29 : vector<4x128xf32>
    %32 = arith.negf %31 : vector<4x128xf32>
    %33 = math.exp %32 : vector<4x128xf32>
    %cst_13 = arith.constant 1.000000e+00 : f32
    %34 = vector.broadcast %cst_13 : f32 to vector<4x128xf32>
    %35 = arith.addf %34, %33 : vector<4x128xf32>
    %36 = arith.divf %34, %35 : vector<4x128xf32>
    %37 = math.tanh %31 : vector<4x128xf32>
    %38 = vector.extract_strided_slice %36 {offsets = [0, 0], sizes = [4, 32], strides = [1, 1]} : vector<4x128xf32> to vector<4x32xf32>
    %39 = vector.extract_strided_slice %36 {offsets = [0, 32], sizes = [4, 32], strides = [1, 1]} : vector<4x128xf32> to vector<4x32xf32>
    %40 = vector.extract_strided_slice %37 {offsets = [0, 64], sizes = [4, 32], strides = [1, 1]} : vector<4x128xf32> to vector<4x32xf32>
    %41 = vector.extract_strided_slice %36 {offsets = [0, 96], sizes = [4, 32], strides = [1, 1]} : vector<4x128xf32> to vector<4x32xf32>
    %42 = arith.mulf %39, %25 : vector<4x32xf32>
    %43 = arith.mulf %38, %40 : vector<4x32xf32>
    %44 = arith.addf %42, %43 : vector<4x32xf32>
    %45 = math.tanh %44 : vector<4x32xf32>
    %46 = arith.mulf %41, %45 : vector<4x32xf32>
    %47 = arith.addf %28, %46 : vector<4x32xf32>
    %48 = vector.extract_strided_slice %5 {offsets = [8, 0], sizes = [4, 128], strides = [1, 1]} : vector<32x128xf32> to vector<4x128xf32>
    %cst_14 = arith.constant dense<0.000000e+00> : vector<4x128xf32>
    %49 = tpu.matmul %46, %6, %cst_14 {dimension_numbers = #tpu.dot_dimension_numbers<[1], [0], [0], [1], [0, 0, 1, 1], [], []>} : vector<4x32xf32>, vector<32x128xf32>, vector<4x128xf32> -> vector<4x128xf32>
    %50 = arith.addf %49, %48 : vector<4x128xf32>
    %51 = arith.negf %50 : vector<4x128xf32>
    %52 = math.exp %51 : vector<4x128xf32>
    %cst_15 = arith.constant 1.000000e+00 : f32
    %53 = vector.broadcast %cst_15 : f32 to vector<4x128xf32>
    %54 = arith.addf %53, %52 : vector<4x128xf32>
    %55 = arith.divf %53, %54 : vector<4x128xf32>
    %56 = math.tanh %50 : vector<4x128xf32>
    %57 = vector.extract_strided_slice %55 {offsets = [0, 0], sizes = [4, 32], strides = [1, 1]} : vector<4x128xf32> to vector<4x32xf32>
    %58 = vector.extract_strided_slice %55 {offsets = [0, 32], sizes = [4, 32], strides = [1, 1]} : vector<4x128xf32> to vector<4x32xf32>
    %59 = vector.extract_strided_slice %56 {offsets = [0, 64], sizes = [4, 32], strides = [1, 1]} : vector<4x128xf32> to vector<4x32xf32>
    %60 = vector.extract_strided_slice %55 {offsets = [0, 96], sizes = [4, 32], strides = [1, 1]} : vector<4x128xf32> to vector<4x32xf32>
    %61 = arith.mulf %58, %44 : vector<4x32xf32>
    %62 = arith.mulf %57, %59 : vector<4x32xf32>
    %63 = arith.addf %61, %62 : vector<4x32xf32>
    %64 = math.tanh %63 : vector<4x32xf32>
    %65 = arith.mulf %60, %64 : vector<4x32xf32>
    %66 = arith.addf %47, %65 : vector<4x32xf32>
    %67 = vector.extract_strided_slice %5 {offsets = [12, 0], sizes = [4, 128], strides = [1, 1]} : vector<32x128xf32> to vector<4x128xf32>
    %cst_16 = arith.constant dense<0.000000e+00> : vector<4x128xf32>
    %68 = tpu.matmul %65, %6, %cst_16 {dimension_numbers = #tpu.dot_dimension_numbers<[1], [0], [0], [1], [0, 0, 1, 1], [], []>} : vector<4x32xf32>, vector<32x128xf32>, vector<4x128xf32> -> vector<4x128xf32>
    %69 = arith.addf %68, %67 : vector<4x128xf32>
    %70 = arith.negf %69 : vector<4x128xf32>
    %71 = math.exp %70 : vector<4x128xf32>
    %cst_17 = arith.constant 1.000000e+00 : f32
    %72 = vector.broadcast %cst_17 : f32 to vector<4x128xf32>
    %73 = arith.addf %72, %71 : vector<4x128xf32>
    %74 = arith.divf %72, %73 : vector<4x128xf32>
    %75 = math.tanh %69 : vector<4x128xf32>
    %76 = vector.extract_strided_slice %74 {offsets = [0, 0], sizes = [4, 32], strides = [1, 1]} : vector<4x128xf32> to vector<4x32xf32>
    %77 = vector.extract_strided_slice %74 {offsets = [0, 32], sizes = [4, 32], strides = [1, 1]} : vector<4x128xf32> to vector<4x32xf32>
    %78 = vector.extract_strided_slice %75 {offsets = [0, 64], sizes = [4, 32], strides = [1, 1]} : vector<4x128xf32> to vector<4x32xf32>
    %79 = vector.extract_strided_slice %74 {offsets = [0, 96], sizes = [4, 32], strides = [1, 1]} : vector<4x128xf32> to vector<4x32xf32>
    %80 = arith.mulf %77, %63 : vector<4x32xf32>
    %81 = arith.mulf %76, %78 : vector<4x32xf32>
    %82 = arith.addf %80, %81 : vector<4x32xf32>
    %83 = math.tanh %82 : vector<4x32xf32>
    %84 = arith.mulf %79, %83 : vector<4x32xf32>
    %85 = arith.addf %66, %84 : vector<4x32xf32>
    %86 = vector.extract_strided_slice %5 {offsets = [16, 0], sizes = [4, 128], strides = [1, 1]} : vector<32x128xf32> to vector<4x128xf32>
    %cst_18 = arith.constant dense<0.000000e+00> : vector<4x128xf32>
    %87 = tpu.matmul %84, %6, %cst_18 {dimension_numbers = #tpu.dot_dimension_numbers<[1], [0], [0], [1], [0, 0, 1, 1], [], []>} : vector<4x32xf32>, vector<32x128xf32>, vector<4x128xf32> -> vector<4x128xf32>
    %88 = arith.addf %87, %86 : vector<4x128xf32>
    %89 = arith.negf %88 : vector<4x128xf32>
    %90 = math.exp %89 : vector<4x128xf32>
    %cst_19 = arith.constant 1.000000e+00 : f32
    %91 = vector.broadcast %cst_19 : f32 to vector<4x128xf32>
    %92 = arith.addf %91, %90 : vector<4x128xf32>
    %93 = arith.divf %91, %92 : vector<4x128xf32>
    %94 = math.tanh %88 : vector<4x128xf32>
    %95 = vector.extract_strided_slice %93 {offsets = [0, 0], sizes = [4, 32], strides = [1, 1]} : vector<4x128xf32> to vector<4x32xf32>
    %96 = vector.extract_strided_slice %93 {offsets = [0, 32], sizes = [4, 32], strides = [1, 1]} : vector<4x128xf32> to vector<4x32xf32>
    %97 = vector.extract_strided_slice %94 {offsets = [0, 64], sizes = [4, 32], strides = [1, 1]} : vector<4x128xf32> to vector<4x32xf32>
    %98 = vector.extract_strided_slice %93 {offsets = [0, 96], sizes = [4, 32], strides = [1, 1]} : vector<4x128xf32> to vector<4x32xf32>
    %99 = arith.mulf %96, %82 : vector<4x32xf32>
    %100 = arith.mulf %95, %97 : vector<4x32xf32>
    %101 = arith.addf %99, %100 : vector<4x32xf32>
    %102 = math.tanh %101 : vector<4x32xf32>
    %103 = arith.mulf %98, %102 : vector<4x32xf32>
    %104 = arith.addf %85, %103 : vector<4x32xf32>
    %105 = vector.extract_strided_slice %5 {offsets = [20, 0], sizes = [4, 128], strides = [1, 1]} : vector<32x128xf32> to vector<4x128xf32>
    %cst_20 = arith.constant dense<0.000000e+00> : vector<4x128xf32>
    %106 = tpu.matmul %103, %6, %cst_20 {dimension_numbers = #tpu.dot_dimension_numbers<[1], [0], [0], [1], [0, 0, 1, 1], [], []>} : vector<4x32xf32>, vector<32x128xf32>, vector<4x128xf32> -> vector<4x128xf32>
    %107 = arith.addf %106, %105 : vector<4x128xf32>
    %108 = arith.negf %107 : vector<4x128xf32>
    %109 = math.exp %108 : vector<4x128xf32>
    %cst_21 = arith.constant 1.000000e+00 : f32
    %110 = vector.broadcast %cst_21 : f32 to vector<4x128xf32>
    %111 = arith.addf %110, %109 : vector<4x128xf32>
    %112 = arith.divf %110, %111 : vector<4x128xf32>
    %113 = math.tanh %107 : vector<4x128xf32>
    %114 = vector.extract_strided_slice %112 {offsets = [0, 0], sizes = [4, 32], strides = [1, 1]} : vector<4x128xf32> to vector<4x32xf32>
    %115 = vector.extract_strided_slice %112 {offsets = [0, 32], sizes = [4, 32], strides = [1, 1]} : vector<4x128xf32> to vector<4x32xf32>
    %116 = vector.extract_strided_slice %113 {offsets = [0, 64], sizes = [4, 32], strides = [1, 1]} : vector<4x128xf32> to vector<4x32xf32>
    %117 = vector.extract_strided_slice %112 {offsets = [0, 96], sizes = [4, 32], strides = [1, 1]} : vector<4x128xf32> to vector<4x32xf32>
    %118 = arith.mulf %115, %101 : vector<4x32xf32>
    %119 = arith.mulf %114, %116 : vector<4x32xf32>
    %120 = arith.addf %118, %119 : vector<4x32xf32>
    %121 = math.tanh %120 : vector<4x32xf32>
    %122 = arith.mulf %117, %121 : vector<4x32xf32>
    %123 = arith.addf %104, %122 : vector<4x32xf32>
    %124 = vector.extract_strided_slice %5 {offsets = [24, 0], sizes = [4, 128], strides = [1, 1]} : vector<32x128xf32> to vector<4x128xf32>
    %cst_22 = arith.constant dense<0.000000e+00> : vector<4x128xf32>
    %125 = tpu.matmul %122, %6, %cst_22 {dimension_numbers = #tpu.dot_dimension_numbers<[1], [0], [0], [1], [0, 0, 1, 1], [], []>} : vector<4x32xf32>, vector<32x128xf32>, vector<4x128xf32> -> vector<4x128xf32>
    %126 = arith.addf %125, %124 : vector<4x128xf32>
    %127 = arith.negf %126 : vector<4x128xf32>
    %128 = math.exp %127 : vector<4x128xf32>
    %cst_23 = arith.constant 1.000000e+00 : f32
    %129 = vector.broadcast %cst_23 : f32 to vector<4x128xf32>
    %130 = arith.addf %129, %128 : vector<4x128xf32>
    %131 = arith.divf %129, %130 : vector<4x128xf32>
    %132 = math.tanh %126 : vector<4x128xf32>
    %133 = vector.extract_strided_slice %131 {offsets = [0, 0], sizes = [4, 32], strides = [1, 1]} : vector<4x128xf32> to vector<4x32xf32>
    %134 = vector.extract_strided_slice %131 {offsets = [0, 32], sizes = [4, 32], strides = [1, 1]} : vector<4x128xf32> to vector<4x32xf32>
    %135 = vector.extract_strided_slice %132 {offsets = [0, 64], sizes = [4, 32], strides = [1, 1]} : vector<4x128xf32> to vector<4x32xf32>
    %136 = vector.extract_strided_slice %131 {offsets = [0, 96], sizes = [4, 32], strides = [1, 1]} : vector<4x128xf32> to vector<4x32xf32>
    %137 = arith.mulf %134, %120 : vector<4x32xf32>
    %138 = arith.mulf %133, %135 : vector<4x32xf32>
    %139 = arith.addf %137, %138 : vector<4x32xf32>
    %140 = math.tanh %139 : vector<4x32xf32>
    %141 = arith.mulf %136, %140 : vector<4x32xf32>
    %142 = arith.addf %123, %141 : vector<4x32xf32>
    %143 = vector.extract_strided_slice %5 {offsets = [28, 0], sizes = [4, 128], strides = [1, 1]} : vector<32x128xf32> to vector<4x128xf32>
    %cst_24 = arith.constant dense<0.000000e+00> : vector<4x128xf32>
    %144 = tpu.matmul %141, %6, %cst_24 {dimension_numbers = #tpu.dot_dimension_numbers<[1], [0], [0], [1], [0, 0, 1, 1], [], []>} : vector<4x32xf32>, vector<32x128xf32>, vector<4x128xf32> -> vector<4x128xf32>
    %145 = arith.addf %144, %143 : vector<4x128xf32>
    %146 = arith.negf %145 : vector<4x128xf32>
    %147 = math.exp %146 : vector<4x128xf32>
    %cst_25 = arith.constant 1.000000e+00 : f32
    %148 = vector.broadcast %cst_25 : f32 to vector<4x128xf32>
    %149 = arith.addf %148, %147 : vector<4x128xf32>
    %150 = arith.divf %148, %149 : vector<4x128xf32>
    %151 = math.tanh %145 : vector<4x128xf32>
    %152 = vector.extract_strided_slice %150 {offsets = [0, 0], sizes = [4, 32], strides = [1, 1]} : vector<4x128xf32> to vector<4x32xf32>
    %153 = vector.extract_strided_slice %150 {offsets = [0, 32], sizes = [4, 32], strides = [1, 1]} : vector<4x128xf32> to vector<4x32xf32>
    %154 = vector.extract_strided_slice %151 {offsets = [0, 64], sizes = [4, 32], strides = [1, 1]} : vector<4x128xf32> to vector<4x32xf32>
    %155 = vector.extract_strided_slice %150 {offsets = [0, 96], sizes = [4, 32], strides = [1, 1]} : vector<4x128xf32> to vector<4x32xf32>
    %156 = arith.mulf %153, %139 : vector<4x32xf32>
    %157 = arith.mulf %152, %154 : vector<4x32xf32>
    %158 = arith.addf %156, %157 : vector<4x32xf32>
    %159 = math.tanh %158 : vector<4x32xf32>
    %160 = arith.mulf %155, %159 : vector<4x32xf32>
    %161 = arith.addf %142, %160 : vector<4x32xf32>
    %cst_26 = arith.constant 1.250000e-01 : f32
    %162 = vector.broadcast %cst_26 : f32 to vector<4x32xf32>
    %163 = arith.mulf %161, %162 : vector<4x32xf32>
    %c0_27 = arith.constant 0 : index
    %c0_28 = arith.constant 0 : index
    %164 = vector.load %arg6[%c0_27, %c0_28] : memref<32x8xf32, #tpu.memory_space<vmem>>, vector<32x8xf32>
    %cst_29 = arith.constant dense<0.000000e+00> : vector<4x8xf32>
    %165 = tpu.matmul %163, %164, %cst_29 {dimension_numbers = #tpu.dot_dimension_numbers<[1], [0], [0], [1], [0, 0, 1, 1], [], []>} : vector<4x32xf32>, vector<32x8xf32>, vector<4x8xf32> -> vector<4x8xf32>
    %c0_30 = arith.constant 0 : index
    %c0_31 = arith.constant 0 : index
    %166 = vector.load %arg4[%c0_30, %c0_31] : memref<4x100xf32, #tpu.memory_space<vmem>>, vector<4x100xf32>
    %c0_32 = arith.constant 0 : index
    %c0_33 = arith.constant 0 : index
    %167 = vector.load %arg5[%c0_32, %c0_33] : memref<100x8xf32, #tpu.memory_space<vmem>>, vector<100x8xf32>
    %cst_34 = arith.constant dense<0.000000e+00> : vector<4x8xf32>
    %168 = tpu.matmul %166, %167, %cst_34 {dimension_numbers = #tpu.dot_dimension_numbers<[1], [0], [0], [1], [0, 0, 1, 1], [], []>} : vector<4x100xf32>, vector<100x8xf32>, vector<4x8xf32> -> vector<4x8xf32>
    %169 = arith.addf %165, %168 : vector<4x8xf32>
    %c0_35 = arith.constant 0 : index
    %c0_36 = arith.constant 0 : index
    %170 = vector.load %arg7[%c0_35, %c0_36] : memref<1x8xf32, #tpu.memory_space<vmem>>, vector<1x8xf32>
    %171 = vector.broadcast %170 : vector<1x8xf32> to vector<4x8xf32>
    %172 = arith.addf %169, %171 : vector<4x8xf32>
    %cst_37 = arith.constant 0.000000e+00 : f32
    %173 = vector.broadcast %cst_37 : f32 to vector<4x8xf32>
    %174 = arith.maximumf %172, %173 : vector<4x8xf32>
    %c0_38 = arith.constant 0 : index
    %c0_39 = arith.constant 0 : index
    %175 = vector.load %arg8[%c0_38, %c0_39] : memref<4x8xf32, #tpu.memory_space<vmem>>, vector<4x8xf32>
    tpu.vector_store %arg8[%c0_38, %c0_39], %174 {strides = array<i32>} : memref<4x8xf32, #tpu.memory_space<vmem>>, vector<4x8xf32>,
    return
  }
}

</mosaic_0001>

<llo_original>
// kernel: tpu_custom_call.1
$region0: #{tpu_custom_call.1}
  #allocation0 [shape = 'u32[]', space=smem, size = 0x4, offset = 0x4, fixed_abs, tag = 'smem constant byte address 0x4 - core index']
  #allocation1 [shape = 'u32[144,128]{1,0:T(1,128)}', space=vmem, size = 0x12000, scoped, tag = 'internal scratch']
  %s0 = inlined_call_operand.vmem [shape: f32[32,16], index: 0, kind: input, shape index: {}]
  %s1 = inlined_call_operand.vmem [shape: f32[16,128], index: 1, kind: input, shape index: {}]
  %s2 = inlined_call_operand.vmem [shape: f32[32,128], index: 2, kind: input, shape index: {}]
  %s3 = inlined_call_operand.vmem [shape: f32[1,128], index: 3, kind: input, shape index: {}]
  %s4 = inlined_call_operand.vmem [shape: f32[4,100], index: 4, kind: input, shape index: {}]
  %s5 = inlined_call_operand.vmem [shape: f32[100,8], index: 5, kind: input, shape index: {}]
  %s6 = inlined_call_operand.vmem [shape: f32[32,8], index: 6, kind: input, shape index: {}]
  %s7 = inlined_call_operand.vmem [shape: f32[1,8], index: 7, kind: input, shape index: {}]
  %s8 = inlined_call_operand.hbm [shape: f32[4,8], index: 8, kind: output, shape index: {}]
  %s9 = sld [smem:[#allocation0]]
  $region42: #{tpu_custom_call.1} parent=0
    _
  %s11 = ssub.s32 1, %s9
  %s12 = scalar_select 0, %s11, %s9
  $region1: #{tpu_custom_call.1} parent=0
    #allocation2 [shape = 'u8[2048]{0}', space=vmem, size = 0x800, scoped, tag = 'output window, operand 0, single buffered']
    #allocation3 [shape = 's32[1]{0}', space=sflag, size = 0x4, scoped, tag = 'scoped memory for tpu_custom_call.1']
    %13 = vsyncpa [#allocation3], 0
    // Predicated region
    $region2: #{tpu_custom_call.1} parent=1 // pred_check
      _
    $region3: #{tpu_custom_call.1} parent=1 // pred_check_branch
      %15 = sbr.rel (0) target = $region5
    $region4: #{tpu_custom_call.1} parent=1 // pred_region
      _
    $region5: #{tpu_custom_call.1} parent=1 // pred_fallthru
      _
    // Predicated region
    $region6: #{tpu_custom_call.1} parent=1 // pred_check
      _
    $region7: #{tpu_custom_call.1} parent=1 // pred_check_branch
      %17 = sbr.rel (0) target = $region9
    $region8: #{tpu_custom_call.1} parent=1 // pred_region
      _
    $region9: #{tpu_custom_call.1} parent=1 // pred_fallthru
      _
    // Predicated region
    $region10: #{tpu_custom_call.1} parent=1 // pred_check
      _
    $region11: #{tpu_custom_call.1} parent=1 // pred_check_branch
      %19 = sbr.rel (0) target = $region13
    $region12: #{tpu_custom_call.1} parent=1 // pred_region
      _
    $region13: #{tpu_custom_call.1} parent=1 // pred_fallthru
      _
    // Predicated region
    $region14: #{tpu_custom_call.1} parent=1 // pred_check
      _
    $region15: #{tpu_custom_call.1} parent=1 // pred_check_branch
      %21 = sbr.rel (0) target = $region17
    $region16: #{tpu_custom_call.1} parent=1 // pred_region
      _
    $region17: #{tpu_custom_call.1} parent=1 // pred_fallthru
      _
    // Predicated region
    $region18: #{tpu_custom_call.1} parent=1 // pred_check
      _
    $region19: #{tpu_custom_call.1} parent=1 // pred_check_branch
      %23 = sbr.rel (0) target = $region21
    $region20: #{tpu_custom_call.1} parent=1 // pred_region
      _
    $region21: #{tpu_custom_call.1} parent=1 // pred_fallthru
      _
    // Predicated region
    $region22: #{tpu_custom_call.1} parent=1 // pred_check
      _
    $region23: #{tpu_custom_call.1} parent=1 // pred_check_branch
      %25 = sbr.rel (0) target = $region25
    $region24: #{tpu_custom_call.1} parent=1 // pred_region
      _
    $region25: #{tpu_custom_call.1} parent=1 // pred_fallthru
      _
    // Predicated region
    $region26: #{tpu_custom_call.1} parent=1 // pred_check
      _
    $region27: #{tpu_custom_call.1} parent=1 // pred_check_branch
      %27 = sbr.rel (0) target = $region29
    $region28: #{tpu_custom_call.1} parent=1 // pred_region
      _
    $region29: #{tpu_custom_call.1} parent=1 // pred_fallthru
      _
    // Predicated region
    $region30: #{tpu_custom_call.1} parent=1 // pred_check
      _
    $region31: #{tpu_custom_call.1} parent=1 // pred_check_branch
      %29 = sbr.rel (0) target = $region33
    $region32: #{tpu_custom_call.1} parent=1 // pred_region
      _
    $region33: #{tpu_custom_call.1} parent=1 // pred_fallthru
      _
    %v30 = vld [vmem:[%s0] sm:$0xff]
    %v31 = vld [vmem:[%s0 + $0x8] sm:$0xff]
    %v32 = vld [vmem:[%s0 + $0x10] sm:$0xff]
    %v33 = vld [vmem:[%s0 + $0x18] sm:$0xff]
    %v34 = vld [vmem:[%s1] sm:$0xff]
    %v35 = vld [vmem:[%s1 + $0x8] sm:$0xff]
    %v36 = vld [vmem:[%s3] sm:$0x1]
    %v38 = vlaneseq
    %v39 = vshrl.u32 %v38, 7
    %v40 = vsub.s32 0, %v39
    %v41 = vrot.slane %v36, %v40
    %vm43 = vcmask 130048
    %v45 = vsel %vm43, %v30, 0
    %v48 = vsel %vm43, %v31, 0
    %v51 = vsel %vm43, %v32, 0
    %v54 = vsel %vm43, %v33, 0
    %56 = vmatprep.subr.mxu0 0.0
    %57 = vmatpush1.msra.mxu0 0.0
    %58 = vmatprep.subr.mxu0 0.0
    %59 = vmatpush1.msra.mxu0 0.0
    %60 = vmatprep.subr.mxu0 0.0
    %61 = vmatpush1.msra.mxu0 0.0
    %62 = vmatprep.subr.mxu0 0.0
    %63 = vmatpush1.msra.mxu0 0.0
    %64 = vmatprep.subr.mxu0 0.0
    %65 = vmatpush1.msra.mxu0 0.0
    %66 = vmatprep.subr.mxu0 0.0
    %67 = vmatpush1.msra.mxu0 0.0
    %68 = vmatprep.subr.mxu0 0.0
    %69 = vmatpush1.msra.mxu0 0.0
    %70 = vmatprep.subr.mxu0 0.0
    %71 = vmatpush1.msra.mxu0 0.0
    %72 = vmatprep.subr.mxu0 0.0
    %73 = vmatpush1.msra.mxu0 0.0
    %74 = vmatprep.subr.mxu0 0.0
    %75 = vmatpush1.msra.mxu0 0.0
    %76 = vmatprep.subr.mxu0 0.0
    %77 = vmatpush1.msra.mxu0 0.0
    %78 = vmatprep.subr.mxu0 0.0
    %79 = vmatpush1.msra.mxu0 0.0
    %80 = vmatprep.subr.mxu0 0.0
    %81 = vmatpush1.msra.mxu0 0.0
    %82 = vmatprep.subr.mxu0 0.0
    %83 = vmatpush1.msra.mxu0 0.0
    %84 = vmatprep.subr.mxu0 0.0
    %85 = vmatpush1.msra.mxu0 %v35
    %86 = vmatprep.subr.mxu0 0.0
    %87 = vmatpush1.msra.mxu0 %v34
    %88 = vmatprep.subr.mxu0 0.0
    %89 = vmatpush2.msra.mxu0 0.0
    %90 = vmatprep.subr.mxu0 0.0
    %91 = vmatpush2.msra.mxu0 0.0
    %92 = vmatprep.subr.mxu0 0.0
    %93 = vmatpush2.msra.mxu0 0.0
    %94 = vmatprep.subr.mxu0 0.0
    %95 = vmatpush2.msra.mxu0 0.0
    %96 = vmatprep.subr.mxu0 0.0
    %97 = vmatpush2.msra.mxu0 0.0
    %98 = vmatprep.subr.mxu0 0.0
    %99 = vmatpush2.msra.mxu0 0.0
    %100 = vmatprep.subr.mxu0 0.0
    %101 = vmatpush2.msra.mxu0 0.0
    %102 = vmatprep.subr.mxu0 0.0
    %103 = vmatpush2.msra.mxu0 0.0
    %104 = vmatprep.subr.mxu0 0.0
    %105 = vmatpush2.msra.mxu0 0.0
    %106 = vmatprep.subr.mxu0 0.0
    %107 = vmatpush2.msra.mxu0 0.0
    %108 = vmatprep.subr.mxu0 0.0
    %109 = vmatpush2.msra.mxu0 0.0
    %110 = vmatprep.subr.mxu0 0.0
    %111 = vmatpush2.msra.mxu0 0.0
    %112 = vmatprep.subr.mxu0 0.0
    %113 = vmatpush2.msra.mxu0 0.0
    %114 = vmatprep.subr.mxu0 0.0
    %115 = vmatpush2.msra.mxu0 0.0
    %116 = vmatprep.subr.mxu0 0.0
    %117 = vmatpush2.msra.mxu0 0.0
    %118 = vmatprep.subr.mxu0 0.0
    %119 = vmatpush2.msra.mxu0 0.0
    %120 = vmatprep.mubr.f32.mxu0 0.0
    %121 = vmatmul.mubr.f32.gmra.mxu0 %v45
    %v122 = vpop.f32.mrf.mxu0
    %v123 = vadd.f32 %v41, %v122
    %v124 = vpop.f32.mrf.mxu0
    %125 = vmatprep.mubr.f32.mxu0 0.0
    %126 = vmatmul.mubr.f32.gmra.mxu0 %v48
    %v127 = vpop.f32.mrf.mxu0
    %v128 = vadd.f32 %v41, %v127
    %v129 = vpop.f32.mrf.mxu0
    %130 = vmatprep.mubr.f32.mxu0 0.0
    %131 = vmatmul.mubr.f32.gmra.mxu0 %v51
    %v132 = vpop.f32.mrf.mxu0
    %v133 = vadd.f32 %v41, %v132
    %v134 = vpop.f32.mrf.mxu0
    %135 = vmatprep.mubr.f32.mxu0 0.0
    %136 = vmatmul.mubr.f32.gmra.mxu0 %v54
    %v137 = vpop.f32.mrf.mxu0
    %v138 = vadd.f32 %v41, %v137
    %v139 = vpop.f32.mrf.mxu0
    %140 = vdwg.mxu0
    %v141 = vld [vmem:[%s2] sm:$0xff]
    %v142 = vld [vmem:[%s2 + $0x8] sm:$0xff]
    %v143 = vld [vmem:[%s2 + $0x10] sm:$0xff]
    %v144 = vld [vmem:[%s2 + $0x18] sm:$0xff]
    %vm145 = vcmask 261120
    %v147 = vsel %vm145, 0.0, 0
    %149 = vmatprep.subr.mxu0 0.0
    %150 = vmatpush1.msra.mxu0 0.0
    %151 = vmatprep.subr.mxu0 0.0
    %152 = vmatpush1.msra.mxu0 0.0
    %153 = vmatprep.subr.mxu0 0.0
    %154 = vmatpush1.msra.mxu0 0.0
    %155 = vmatprep.subr.mxu0 0.0
    %156 = vmatpush1.msra.mxu0 0.0
    %157 = vmatprep.subr.mxu0 0.0
    %158 = vmatpush1.msra.mxu0 0.0
    %159 = vmatprep.subr.mxu0 0.0
    %160 = vmatpush1.msra.mxu0 0.0
    %161 = vmatprep.subr.mxu0 0.0
    %162 = vmatpush1.msra.mxu0 0.0
    %163 = vmatprep.subr.mxu0 0.0
    %164 = vmatpush1.msra.mxu0 0.0
    %165 = vmatprep.subr.mxu0 0.0
    %166 = vmatpush1.msra.mxu0 0.0
    %167 = vmatprep.subr.mxu0 0.0
    %168 = vmatpush1.msra.mxu0 0.0
    %169 = vmatprep.subr.mxu0 0.0
    %170 = vmatpush1.msra.mxu0 0.0
    %171 = vmatprep.subr.mxu0 0.0
    %172 = vmatpush1.msra.mxu0 0.0
    %173 = vmatprep.subr.mxu0 0.0
    %174 = vmatpush1.msra.mxu0 %v144
    %175 = vmatprep.subr.mxu0 0.0
    %176 = vmatpush1.msra.mxu0 %v143
    %177 = vmatprep.subr.mxu0 0.0
    %178 = vmatpush1.msra.mxu0 %v142
    %179 = vmatprep.subr.mxu0 0.0
    %180 = vmatpush1.msra.mxu0 %v141
    %181 = vmatprep.subr.mxu0 0.0
    %182 = vmatpush2.msra.mxu0 0.0
    %183 = vmatprep.subr.mxu0 0.0
    %184 = vmatpush2.msra.mxu0 0.0
    %185 = vmatprep.subr.mxu0 0.0
    %186 = vmatpush2.msra.mxu0 0.0
    %187 = vmatprep.subr.mxu0 0.0
    %188 = vmatpush2.msra.mxu0 0.0
    %189 = vmatprep.subr.mxu0 0.0
    %190 = vmatpush2.msra.mxu0 0.0
    %191 = vmatprep.subr.mxu0 0.0
    %192 = vmatpush2.msra.mxu0 0.0
    %193 = vmatprep.subr.mxu0 0.0
    %194 = vmatpush2.msra.mxu0 0.0
    %195 = vmatprep.subr.mxu0 0.0
    %196 = vmatpush2.msra.mxu0 0.0
    %197 = vmatprep.subr.mxu0 0.0
    %198 = vmatpush2.msra.mxu0 0.0
    %199 = vmatprep.subr.mxu0 0.0
    %200 = vmatpush2.msra.mxu0 0.0
    %201 = vmatprep.subr.mxu0 0.0
    %202 = vmatpush2.msra.mxu0 0.0
    %203 = vmatprep.subr.mxu0 0.0
    %204 = vmatpush2.msra.mxu0 0.0
    %205 = vmatprep.subr.mxu0 0.0
    %206 = vmatpush2.msra.mxu0 0.0
    %207 = vmatprep.subr.mxu0 0.0
    %208 = vmatpush2.msra.mxu0 0.0
    %209 = vmatprep.subr.mxu0 0.0
    %210 = vmatpush2.msra.mxu0 0.0
    %211 = vmatprep.subr.mxu0 0.0
    %212 = vmatpush2.msra.mxu0 0.0
    %213 = vmatprep.mubr.f32.mxu0 0.0
    %214 = vmatmul.mubr.f32.gmra.mxu0 %v147
    %v215 = vpop.f32.mrf.mxu0
    %v216 = vadd.f32 %v123, %v215
    %v217 = vpop.f32.mrf.mxu0
    %218 = vdwg.mxu0
    %v219 = vxor.u32 %v216, 2147483648
    %v220 = vmul.f32 %v219, 1.442695
    %v221 = vpow.pop %v220
    %v222 = vadd.f32 %v221, 1.0
    %v223 = vrcp.pop %v222
    %v224 = vmul.f32 1.0, %v223
    %v225 = vtanh.pop %v216
    %v226 = vmul.f32 %v224, 0.0
    %228 = vrot.lane.b32.xlu0 %v225, 64
    %v229 = vpop.permute.xlu0 %228
    %v231 = vmul.f32 %v224, %v229
    %233 = vrot.lane.b32.xlu0 %v231, 32
    %v234 = vpop.permute.xlu0 %233
    %v236 = vadd.f32 %v226, %v234
    %v237 = vtanh.pop %v236
    %239 = vrot.lane.b32.xlu0 %v237, 64
    %v240 = vpop.permute.xlu0 %239
    %v242 = vmul.f32 %v224, %v240
    %v243 = vadd.f32 %v242, 0.0
    %245 = vrot.lane.b32.xlu0 %v242, 32
    %v246 = vpop.permute.xlu0 %245
    %v248 = vrot.slane %v123, 4
    %v250 = vsel %vm145, %v246, 0
    %252 = vmatprep.subr.mxu0 0.0
    %253 = vmatpush1.msra.mxu0 0.0
    %254 = vmatprep.subr.mxu0 0.0
    %255 = vmatpush1.msra.mxu0 0.0
    %256 = vmatprep.subr.mxu0 0.0
    %257 = vmatpush1.msra.mxu0 0.0
    %258 = vmatprep.subr.mxu0 0.0
    %259 = vmatpush1.msra.mxu0 0.0
    %260 = vmatprep.subr.mxu0 0.0
    %261 = vmatpush1.msra.mxu0 0.0
    %262 = vmatprep.subr.mxu0 0.0
    %263 = vmatpush1.msra.mxu0 0.0
    %264 = vmatprep.subr.mxu0 0.0
    %265 = vmatpush1.msra.mxu0 0.0
    %266 = vmatprep.subr.mxu0 0.0
    %267 = vmatpush1.msra.mxu0 0.0
    %268 = vmatprep.subr.mxu0 0.0
    %269 = vmatpush1.msra.mxu0 0.0
    %270 = vmatprep.subr.mxu0 0.0
    %271 = vmatpush1.msra.mxu0 0.0
    %272 = vmatprep.subr.mxu0 0.0
    %273 = vmatpush1.msra.mxu0 0.0
    %274 = vmatprep.subr.mxu0 0.0
    %275 = vmatpush1.msra.mxu0 0.0
    %276 = vmatprep.subr.mxu0 0.0
    %277 = vmatpush1.msra.mxu0 %v144
    %278 = vmatprep.subr.mxu0 0.0
    %279 = vmatpush1.msra.mxu0 %v143
    %280 = vmatprep.subr.mxu0 0.0
    %281 = vmatpush1.msra.mxu0 %v142
    %282 = vmatprep.subr.mxu0 0.0
    %283 = vmatpush1.msra.mxu0 %v141
    %284 = vmatprep.subr.mxu0 0.0
    %285 = vmatpush2.msra.mxu0 0.0
    %286 = vmatprep.subr.mxu0 0.0
    %287 = vmatpush2.msra.mxu0 0.0
    %288 = vmatprep.subr.mxu0 0.0
    %289 = vmatpush2.msra.mxu0 0.0
    %290 = vmatprep.subr.mxu0 0.0
    %291 = vmatpush2.msra.mxu0 0.0
    %292 = vmatprep.subr.mxu0 0.0
    %293 = vmatpush2.msra.mxu0 0.0
    %294 = vmatprep.subr.mxu0 0.0
    %295 = vmatpush2.msra.mxu0 0.0
    %296 = vmatprep.subr.mxu0 0.0
    %297 = vmatpush2.msra.mxu0 0.0
    %298 = vmatprep.subr.mxu0 0.0
    %299 = vmatpush2.msra.mxu0 0.0
    %300 = vmatprep.subr.mxu0 0.0
    %301 = vmatpush2.msra.mxu0 0.0
    %302 = vmatprep.subr.mxu0 0.0
    %303 = vmatpush2.msra.mxu0 0.0
    %304 = vmatprep.subr.mxu0 0.0
    %305 = vmatpush2.msra.mxu0 0.0
    %306 = vmatprep.subr.mxu0 0.0
    %307 = vmatpush2.msra.mxu0 0.0
    %308 = vmatprep.subr.mxu0 0.0
    %309 = vmatpush2.msra.mxu0 0.0
    %310 = vmatprep.subr.mxu0 0.0
    %311 = vmatpush2.msra.mxu0 0.0
    %312 = vmatprep.subr.mxu0 0.0
    %313 = vmatpush2.msra.mxu0 0.0
    %314 = vmatprep.subr.mxu0 0.0
    %315 = vmatpush2.msra.mxu0 0.0
    %316 = vmatprep.mubr.f32.mxu0 0.0
    %317 = vmatmul.mubr.f32.gmra.mxu0 %v250
    %v318 = vpop.f32.mrf.mxu0
    %v319 = vadd.f32 %v248, %v318
    %v320 = vpop.f32.mrf.mxu0
    %321 = vdwg.mxu0
    %v322 = vxor.u32 %v319, 2147483648
    %v323 = vmul.f32 %v322, 1.442695
    %v324 = vpow.pop %v323
    %v325 = vadd.f32 %v324, 1.0
    %v326 = vrcp.pop %v325
    %v327 = vmul.f32 1.0, %v326
    %v328 = vtanh.pop %v319
    %v329 = vmul.f32 %v327, %v236
    %331 = vrot.lane.b32.xlu0 %v328, 64
    %v332 = vpop.permute.xlu0 %331
    %v334 = vmul.f32 %v327, %v332
    %336 = vrot.lane.b32.xlu0 %v334, 32
    %v337 = vpop.permute.xlu0 %336
    %v339 = vadd.f32 %v329, %v337
    %v340 = vtanh.pop %v339
    %342 = vrot.lane.b32.xlu0 %v340, 64
    %v343 = vpop.permute.xlu0 %342
    %v345 = vmul.f32 %v327, %v343
    %v346 = vadd.f32 %v243, %v345
    %348 = vrot.lane.b32.xlu0 %v345, 32
    %v349 = vpop.permute.xlu0 %348
    %v350 = vsel %vm145, %v349, 0
    %352 = vmatprep.subr.mxu0 0.0
    %353 = vmatpush1.msra.mxu0 0.0
    %354 = vmatprep.subr.mxu0 0.0
    %355 = vmatpush1.msra.mxu0 0.0
    %356 = vmatprep.subr.mxu0 0.0
    %357 = vmatpush1.msra.mxu0 0.0
    %358 = vmatprep.subr.mxu0 0.0
    %359 = vmatpush1.msra.mxu0 0.0
    %360 = vmatprep.subr.mxu0 0.0
    %361 = vmatpush1.msra.mxu0 0.0
    %362 = vmatprep.subr.mxu0 0.0
    %363 = vmatpush1.msra.mxu0 0.0
    %364 = vmatprep.subr.mxu0 0.0
    %365 = vmatpush1.msra.mxu0 0.0
    %366 = vmatprep.subr.mxu0 0.0
    %367 = vmatpush1.msra.mxu0 0.0
    %368 = vmatprep.subr.mxu0 0.0
    %369 = vmatpush1.msra.mxu0 0.0
    %370 = vmatprep.subr.mxu0 0.0
    %371 = vmatpush1.msra.mxu0 0.0
    %372 = vmatprep.subr.mxu0 0.0
    %373 = vmatpush1.msra.mxu0 0.0
    %374 = vmatprep.subr.mxu0 0.0
    %375 = vmatpush1.msra.mxu0 0.0
    %376 = vmatprep.subr.mxu0 0.0
    %377 = vmatpush1.msra.mxu0 %v144
    %378 = vmatprep.subr.mxu0 0.0
    %379 = vmatpush1.msra.mxu0 %v143
    %380 = vmatprep.subr.mxu0 0.0
    %381 = vmatpush1.msra.mxu0 %v142
    %382 = vmatprep.subr.mxu0 0.0
    %383 = vmatpush1.msra.mxu0 %v141
    %384 = vmatprep.subr.mxu0 0.0
    %385 = vmatpush2.msra.mxu0 0.0
    %386 = vmatprep.subr.mxu0 0.0
    %387 = vmatpush2.msra.mxu0 0.0
    %388 = vmatprep.subr.mxu0 0.0
    %389 = vmatpush2.msra.mxu0 0.0
    %390 = vmatprep.subr.mxu0 0.0
    %391 = vmatpush2.msra.mxu0 0.0
    %392 = vmatprep.subr.mxu0 0.0
    %393 = vmatpush2.msra.mxu0 0.0
    %394 = vmatprep.subr.mxu0 0.0
    %395 = vmatpush2.msra.mxu0 0.0
    %396 = vmatprep.subr.mxu0 0.0
    %397 = vmatpush2.msra.mxu0 0.0
    %398 = vmatprep.subr.mxu0 0.0
    %399 = vmatpush2.msra.mxu0 0.0
    %400 = vmatprep.subr.mxu0 0.0
    %401 = vmatpush2.msra.mxu0 0.0
    %402 = vmatprep.subr.mxu0 0.0
    %403 = vmatpush2.msra.mxu0 0.0
    %404 = vmatprep.subr.mxu0 0.0
    %405 = vmatpush2.msra.mxu0 0.0
    %406 = vmatprep.subr.mxu0 0.0
    %407 = vmatpush2.msra.mxu0 0.0
    %408 = vmatprep.subr.mxu0 0.0
    %409 = vmatpush2.msra.mxu0 0.0
    %410 = vmatprep.subr.mxu0 0.0
    %411 = vmatpush2.msra.mxu0 0.0
    %412 = vmatprep.subr.mxu0 0.0
    %413 = vmatpush2.msra.mxu0 0.0
    %414 = vmatprep.subr.mxu0 0.0
    %415 = vmatpush2.msra.mxu0 0.0
    %416 = vmatprep.mubr.f32.mxu0 0.0
    %417 = vmatmul.mubr.f32.gmra.mxu0 %v350
    %v418 = vpop.f32.mrf.mxu0
    %v419 = vadd.f32 %v128, %v418
    %v420 = vpop.f32.mrf.mxu0
    %421 = vdwg.mxu0
    %v422 = vxor.u32 %v419, 2147483648
    %v423 = vmul.f32 %v422, 1.442695
    %v424 = vpow.pop %v423
    %v425 = vadd.f32 %v424, 1.0
    %v426 = vrcp.pop %v425
    %v427 = vmul.f32 1.0, %v426
    %v428 = vtanh.pop %v419
    %v429 = vmul.f32 %v427, %v339
    %431 = vrot.lane.b32.xlu0 %v428, 64
    %v432 = vpop.permute.xlu0 %431
    %v434 = vmul.f32 %v427, %v432
    %436 = vrot.lane.b32.xlu0 %v434, 32
    %v437 = vpop.permute.xlu0 %436
    %v439 = vadd.f32 %v429, %v437
    %v440 = vtanh.pop %v439
    %442 = vrot.lane.b32.xlu0 %v440, 64
    %v443 = vpop.permute.xlu0 %442
    %v445 = vmul.f32 %v427, %v443
    %v446 = vadd.f32 %v346, %v445
    %448 = vrot.lane.b32.xlu0 %v445, 32
    %v449 = vpop.permute.xlu0 %448
    %v451 = vrot.slane %v128, 4
    %v453 = vsel %vm145, %v449, 0
    %455 = vmatprep.subr.mxu0 0.0
    %456 = vmatpush1.msra.mxu0 0.0
    %457 = vmatprep.subr.mxu0 0.0
    %458 = vmatpush1.msra.mxu0 0.0
    %459 = vmatprep.subr.mxu0 0.0
    %460 = vmatpush1.msra.mxu0 0.0
    %461 = vmatprep.subr.mxu0 0.0
    %462 = vmatpush1.msra.mxu0 0.0
    %463 = vmatprep.subr.mxu0 0.0
    %464 = vmatpush1.msra.mxu0 0.0
    %465 = vmatprep.subr.mxu0 0.0
    %466 = vmatpush1.msra.mxu0 0.0
    %467 = vmatprep.subr.mxu0 0.0
    %468 = vmatpush1.msra.mxu0 0.0
    %469 = vmatprep.subr.mxu0 0.0
    %470 = vmatpush1.msra.mxu0 0.0
    %471 = vmatprep.subr.mxu0 0.0
    %472 = vmatpush1.msra.mxu0 0.0
    %473 = vmatprep.subr.mxu0 0.0
    %474 = vmatpush1.msra.mxu0 0.0
    %475 = vmatprep.subr.mxu0 0.0
    %476 = vmatpush1.msra.mxu0 0.0
    %477 = vmatprep.subr.mxu0 0.0
    %478 = vmatpush1.msra.mxu0 0.0
    %479 = vmatprep.subr.mxu0 0.0
    %480 = vmatpush1.msra.mxu0 %v144
    %481 = vmatprep.subr.mxu0 0.0
    %482 = vmatpush1.msra.mxu0 %v143
    %483 = vmatprep.subr.mxu0 0.0
    %484 = vmatpush1.msra.mxu0 %v142
    %485 = vmatprep.subr.mxu0 0.0
    %486 = vmatpush1.msra.mxu0 %v141
    %487 = vmatprep.subr.mxu0 0.0
    %488 = vmatpush2.msra.mxu0 0.0
    %489 = vmatprep.subr.mxu0 0.0
    %490 = vmatpush2.msra.mxu0 0.0
    %491 = vmatprep.subr.mxu0 0.0
    %492 = vmatpush2.msra.mxu0 0.0
    %493 = vmatprep.subr.mxu0 0.0
    %494 = vmatpush2.msra.mxu0 0.0
    %495 = vmatprep.subr.mxu0 0.0
    %496 = vmatpush2.msra.mxu0 0.0
    %497 = vmatprep.subr.mxu0 0.0
    %498 = vmatpush2.msra.mxu0 0.0
    %499 = vmatprep.subr.mxu0 0.0
    %500 = vmatpush2.msra.mxu0 0.0
    %501 = vmatprep.subr.mxu0 0.0
    %502 = vmatpush2.msra.mxu0 0.0
    %503 = vmatprep.subr.mxu0 0.0
    %504 = vmatpush2.msra.mxu0 0.0
    %505 = vmatprep.subr.mxu0 0.0
    %506 = vmatpush2.msra.mxu0 0.0
    %507 = vmatprep.subr.mxu0 0.0
    %508 = vmatpush2.msra.mxu0 0.0
    %509 = vmatprep.subr.mxu0 0.0
    %510 = vmatpush2.msra.mxu0 0.0
    %511 = vmatprep.subr.mxu0 0.0
    %512 = vmatpush2.msra.mxu0 0.0
    %513 = vmatprep.subr.mxu0 0.0
    %514 = vmatpush2.msra.mxu0 0.0
    %515 = vmatprep.subr.mxu0 0.0
    %516 = vmatpush2.msra.mxu0 0.0
    %517 = vmatprep.subr.mxu0 0.0
    %518 = vmatpush2.msra.mxu0 0.0
    %519 = vmatprep.mubr.f32.mxu0 0.0
    %520 = vmatmul.mubr.f32.gmra.mxu0 %v453
    %v521 = vpop.f32.mrf.mxu0
    %v522 = vadd.f32 %v451, %v521
    %v523 = vpop.f32.mrf.mxu0
    %524 = vdwg.mxu0
    %v525 = vxor.u32 %v522, 2147483648
    %v526 = vmul.f32 %v525, 1.442695
    %v527 = vpow.pop %v526
    %v528 = vadd.f32 %v527, 1.0
    %v529 = vrcp.pop %v528
    %v530 = vmul.f32 1.0, %v529
    %v531 = vtanh.pop %v522
    %v532 = vmul.f32 %v530, %v439
    %534 = vrot.lane.b32.xlu0 %v531, 64
    %v535 = vpop.permute.xlu0 %534
    %v537 = vmul.f32 %v530, %v535
    %539 = vrot.lane.b32.xlu0 %v537, 32
    %v540 = vpop.permute.xlu0 %539
    %v542 = vadd.f32 %v532, %v540
    %v543 = vtanh.pop %v542
    %545 = vrot.lane.b32.xlu0 %v543, 64
    %v546 = vpop.permute.xlu0 %545
    %v548 = vmul.f32 %v530, %v546
    %v549 = vadd.f32 %v446, %v548
    %551 = vrot.lane.b32.xlu0 %v548, 32
    %v552 = vpop.permute.xlu0 %551
    %v553 = vsel %vm145, %v552, 0
    %555 = vmatprep.subr.mxu0 0.0
    %556 = vmatpush1.msra.mxu0 0.0
    %557 = vmatprep.subr.mxu0 0.0
    %558 = vmatpush1.msra.mxu0 0.0
    %559 = vmatprep.subr.mxu0 0.0
    %560 = vmatpush1.msra.mxu0 0.0
    %561 = vmatprep.subr.mxu0 0.0
    %562 = vmatpush1.msra.mxu0 0.0
    %563 = vmatprep.subr.mxu0 0.0
    %564 = vmatpush1.msra.mxu0 0.0
    %565 = vmatprep.subr.mxu0 0.0
    %566 = vmatpush1.msra.mxu0 0.0
    %567 = vmatprep.subr.mxu0 0.0
    %568 = vmatpush1.msra.mxu0 0.0
    %569 = vmatprep.subr.mxu0 0.0
    %570 = vmatpush1.msra.mxu0 0.0
    %571 = vmatprep.subr.mxu0 0.0
    %572 = vmatpush1.msra.mxu0 0.0
    %573 = vmatprep.subr.mxu0 0.0
    %574 = vmatpush1.msra.mxu0 0.0
    %575 = vmatprep.subr.mxu0 0.0
    %576 = vmatpush1.msra.mxu0 0.0
    %577 = vmatprep.subr.mxu0 0.0
    %578 = vmatpush1.msra.mxu0 0.0
    %579 = vmatprep.subr.mxu0 0.0
    %580 = vmatpush1.msra.mxu0 %v144
    %581 = vmatprep.subr.mxu0 0.0
    %582 = vmatpush1.msra.mxu0 %v143
    %583 = vmatprep.subr.mxu0 0.0
    %584 = vmatpush1.msra.mxu0 %v142
    %585 = vmatprep.subr.mxu0 0.0
    %586 = vmatpush1.msra.mxu0 %v141
    %587 = vmatprep.subr.mxu0 0.0
    %588 = vmatpush2.msra.mxu0 0.0
    %589 = vmatprep.subr.mxu0 0.0
    %590 = vmatpush2.msra.mxu0 0.0
    %591 = vmatprep.subr.mxu0 0.0
    %592 = vmatpush2.msra.mxu0 0.0
    %593 = vmatprep.subr.mxu0 0.0
    %594 = vmatpush2.msra.mxu0 0.0
    %595 = vmatprep.subr.mxu0 0.0
    %596 = vmatpush2.msra.mxu0 0.0
    %597 = vmatprep.subr.mxu0 0.0
    %598 = vmatpush2.msra.mxu0 0.0
    %599 = vmatprep.subr.mxu0 0.0
    %600 = vmatpush2.msra.mxu0 0.0
    %601 = vmatprep.subr.mxu0 0.0
    %602 = vmatpush2.msra.mxu0 0.0
    %603 = vmatprep.subr.mxu0 0.0
    %604 = vmatpush2.msra.mxu0 0.0
    %605 = vmatprep.subr.mxu0 0.0
    %606 = vmatpush2.msra.mxu0 0.0
    %607 = vmatprep.subr.mxu0 0.0
    %608 = vmatpush2.msra.mxu0 0.0
    %609 = vmatprep.subr.mxu0 0.0
    %610 = vmatpush2.msra.mxu0 0.0
    %611 = vmatprep.subr.mxu0 0.0
    %612 = vmatpush2.msra.mxu0 0.0
    %613 = vmatprep.subr.mxu0 0.0
    %614 = vmatpush2.msra.mxu0 0.0
    %615 = vmatprep.subr.mxu0 0.0
    %616 = vmatpush2.msra.mxu0 0.0
    %617 = vmatprep.subr.mxu0 0.0
    %618 = vmatpush2.msra.mxu0 0.0
    %619 = vmatprep.mubr.f32.mxu0 0.0
    %620 = vmatmul.mubr.f32.gmra.mxu0 %v553
    %v621 = vpop.f32.mrf.mxu0
    %v622 = vadd.f32 %v133, %v621
    %v623 = vpop.f32.mrf.mxu0
    %624 = vdwg.mxu0
    %v625 = vxor.u32 %v622, 2147483648
    %v626 = vmul.f32 %v625, 1.442695
    %v627 = vpow.pop %v626
    %v628 = vadd.f32 %v627, 1.0
    %v629 = vrcp.pop %v628
    %v630 = vmul.f32 1.0, %v629
    %v631 = vtanh.pop %v622
    %v632 = vmul.f32 %v630, %v542
    %634 = vrot.lane.b32.xlu0 %v631, 64
    %v635 = vpop.permute.xlu0 %634
    %v637 = vmul.f32 %v630, %v635
    %639 = vrot.lane.b32.xlu0 %v637, 32
    %v640 = vpop.permute.xlu0 %639
    %v642 = vadd.f32 %v632, %v640
    %v643 = vtanh.pop %v642
    %645 = vrot.lane.b32.xlu0 %v643, 64
    %v646 = vpop.permute.xlu0 %645
    %v648 = vmul.f32 %v630, %v646
    %v649 = vadd.f32 %v549, %v648
    %651 = vrot.lane.b32.xlu0 %v648, 32
    %v652 = vpop.permute.xlu0 %651
    %v654 = vrot.slane %v133, 4
    %v656 = vsel %vm145, %v652, 0
    %658 = vmatprep.subr.mxu0 0.0
    %659 = vmatpush1.msra.mxu0 0.0
    %660 = vmatprep.subr.mxu0 0.0
    %661 = vmatpush1.msra.mxu0 0.0
    %662 = vmatprep.subr.mxu0 0.0
    %663 = vmatpush1.msra.mxu0 0.0
    %664 = vmatprep.subr.mxu0 0.0
    %665 = vmatpush1.msra.mxu0 0.0
    %666 = vmatprep.subr.mxu0 0.0
    %667 = vmatpush1.msra.mxu0 0.0
    %668 = vmatprep.subr.mxu0 0.0
    %669 = vmatpush1.msra.mxu0 0.0
    %670 = vmatprep.subr.mxu0 0.0
    %671 = vmatpush1.msra.mxu0 0.0
    %672 = vmatprep.subr.mxu0 0.0
    %673 = vmatpush1.msra.mxu0 0.0
    %674 = vmatprep.subr.mxu0 0.0
    %675 = vmatpush1.msra.mxu0 0.0
    %676 = vmatprep.subr.mxu0 0.0
    %677 = vmatpush1.msra.mxu0 0.0
    %678 = vmatprep.subr.mxu0 0.0
    %679 = vmatpush1.msra.mxu0 0.0
    %680 = vmatprep.subr.mxu0 0.0
    %681 = vmatpush1.msra.mxu0 0.0
    %682 = vmatprep.subr.mxu0 0.0
    %683 = vmatpush1.msra.mxu0 %v144
    %684 = vmatprep.subr.mxu0 0.0
    %685 = vmatpush1.msra.mxu0 %v143
    %686 = vmatprep.subr.mxu0 0.0
    %687 = vmatpush1.msra.mxu0 %v142
    %688 = vmatprep.subr.mxu0 0.0
    %689 = vmatpush1.msra.mxu0 %v141
    %690 = vmatprep.subr.mxu0 0.0
    %691 = vmatpush2.msra.mxu0 0.0
    %692 = vmatprep.subr.mxu0 0.0
    %693 = vmatpush2.msra.mxu0 0.0
    %694 = vmatprep.subr.mxu0 0.0
    %695 = vmatpush2.msra.mxu0 0.0
    %696 = vmatprep.subr.mxu0 0.0
    %697 = vmatpush2.msra.mxu0 0.0
    %698 = vmatprep.subr.mxu0 0.0
    %699 = vmatpush2.msra.mxu0 0.0
    %700 = vmatprep.subr.mxu0 0.0
    %701 = vmatpush2.msra.mxu0 0.0
    %702 = vmatprep.subr.mxu0 0.0
    %703 = vmatpush2.msra.mxu0 0.0
    %704 = vmatprep.subr.mxu0 0.0
    %705 = vmatpush2.msra.mxu0 0.0
    %706 = vmatprep.subr.mxu0 0.0
    %707 = vmatpush2.msra.mxu0 0.0
    %708 = vmatprep.subr.mxu0 0.0
    %709 = vmatpush2.msra.mxu0 0.0
    %710 = vmatprep.subr.mxu0 0.0
    %711 = vmatpush2.msra.mxu0 0.0
    %712 = vmatprep.subr.mxu0 0.0
    %713 = vmatpush2.msra.mxu0 0.0
    %714 = vmatprep.subr.mxu0 0.0
    %715 = vmatpush2.msra.mxu0 0.0
    %716 = vmatprep.subr.mxu0 0.0
    %717 = vmatpush2.msra.mxu0 0.0
    %718 = vmatprep.subr.mxu0 0.0
    %719 = vmatpush2.msra.mxu0 0.0
    %720 = vmatprep.subr.mxu0 0.0
    %721 = vmatpush2.msra.mxu0 0.0
    %722 = vmatprep.mubr.f32.mxu0 0.0
    %723 = vmatmul.mubr.f32.gmra.mxu0 %v656
    %v724 = vpop.f32.mrf.mxu0
    %v725 = vadd.f32 %v654, %v724
    %v726 = vpop.f32.mrf.mxu0
    %727 = vdwg.mxu0
    %v728 = vxor.u32 %v725, 2147483648
    %v729 = vmul.f32 %v728, 1.442695
    %v730 = vpow.pop %v729
    %v731 = vadd.f32 %v730, 1.0
    %v732 = vrcp.pop %v731
    %v733 = vmul.f32 1.0, %v732
    %v734 = vtanh.pop %v725
    %v735 = vmul.f32 %v733, %v642
    %737 = vrot.lane.b32.xlu0 %v734, 64
    %v738 = vpop.permute.xlu0 %737
    %v740 = vmul.f32 %v733, %v738
    %742 = vrot.lane.b32.xlu0 %v740, 32
    %v743 = vpop.permute.xlu0 %742
    %v745 = vadd.f32 %v735, %v743
    %v746 = vtanh.pop %v745
    %748 = vrot.lane.b32.xlu0 %v746, 64
    %v749 = vpop.permute.xlu0 %748
    %v751 = vmul.f32 %v733, %v749
    %v752 = vadd.f32 %v649, %v751
    %754 = vrot.lane.b32.xlu0 %v751, 32
    %v755 = vpop.permute.xlu0 %754
    %v756 = vsel %vm145, %v755, 0
    %758 = vmatprep.subr.mxu0 0.0
    %759 = vmatpush1.msra.mxu0 0.0
    %760 = vmatprep.subr.mxu0 0.0
    %761 = vmatpush1.msra.mxu0 0.0
    %762 = vmatprep.subr.mxu0 0.0
    %763 = vmatpush1.msra.mxu0 0.0
    %764 = vmatprep.subr.mxu0 0.0
    %765 = vmatpush1.msra.mxu0 0.0
    %766 = vmatprep.subr.mxu0 0.0
    %767 = vmatpush1.msra.mxu0 0.0
    %768 = vmatprep.subr.mxu0 0.0
    %769 = vmatpush1.msra.mxu0 0.0
    %770 = vmatprep.subr.mxu0 0.0
    %771 = vmatpush1.msra.mxu0 0.0
    %772 = vmatprep.subr.mxu0 0.0
    %773 = vmatpush1.msra.mxu0 0.0
    %774 = vmatprep.subr.mxu0 0.0
    %775 = vmatpush1.msra.mxu0 0.0
    %776 = vmatprep.subr.mxu0 0.0
    %777 = vmatpush1.msra.mxu0 0.0
    %778 = vmatprep.subr.mxu0 0.0
    %779 = vmatpush1.msra.mxu0 0.0
    %780 = vmatprep.subr.mxu0 0.0
    %781 = vmatpush1.msra.mxu0 0.0
    %782 = vmatprep.subr.mxu0 0.0
    %783 = vmatpush1.msra.mxu0 %v144
    %784 = vmatprep.subr.mxu0 0.0
    %785 = vmatpush1.msra.mxu0 %v143
    %786 = vmatprep.subr.mxu0 0.0
    %787 = vmatpush1.msra.mxu0 %v142
    %788 = vmatprep.subr.mxu0 0.0
    %789 = vmatpush1.msra.mxu0 %v141
    %790 = vmatprep.subr.mxu0 0.0
    %791 = vmatpush2.msra.mxu0 0.0
    %792 = vmatprep.subr.mxu0 0.0
    %793 = vmatpush2.msra.mxu0 0.0
    %794 = vmatprep.subr.mxu0 0.0
    %795 = vmatpush2.msra.mxu0 0.0
    %796 = vmatprep.subr.mxu0 0.0
    %797 = vmatpush2.msra.mxu0 0.0
    %798 = vmatprep.subr.mxu0 0.0
    %799 = vmatpush2.msra.mxu0 0.0
    %800 = vmatprep.subr.mxu0 0.0
    %801 = vmatpush2.msra.mxu0 0.0
    %802 = vmatprep.subr.mxu0 0.0
    %803 = vmatpush2.msra.mxu0 0.0
    %804 = vmatprep.subr.mxu0 0.0
    %805 = vmatpush2.msra.mxu0 0.0
    %806 = vmatprep.subr.mxu0 0.0
    %807 = vmatpush2.msra.mxu0 0.0
    %808 = vmatprep.subr.mxu0 0.0
    %809 = vmatpush2.msra.mxu0 0.0
    %810 = vmatprep.subr.mxu0 0.0
    %811 = vmatpush2.msra.mxu0 0.0
    %812 = vmatprep.subr.mxu0 0.0
    %813 = vmatpush2.msra.mxu0 0.0
    %814 = vmatprep.subr.mxu0 0.0
    %815 = vmatpush2.msra.mxu0 0.0
    %816 = vmatprep.subr.mxu0 0.0
    %817 = vmatpush2.msra.mxu0 0.0
    %818 = vmatprep.subr.mxu0 0.0
    %819 = vmatpush2.msra.mxu0 0.0
    %820 = vmatprep.subr.mxu0 0.0
    %821 = vmatpush2.msra.mxu0 0.0
    %822 = vmatprep.mubr.f32.mxu0 0.0
    %823 = vmatmul.mubr.f32.gmra.mxu0 %v756
    %v824 = vpop.f32.mrf.mxu0
    %v825 = vadd.f32 %v138, %v824
    %v826 = vpop.f32.mrf.mxu0
    %827 = vdwg.mxu0
    %v828 = vxor.u32 %v825, 2147483648
    %v829 = vmul.f32 %v828, 1.442695
    %v830 = vpow.pop %v829
    %v831 = vadd.f32 %v830, 1.0
    %v832 = vrcp.pop %v831
    %v833 = vmul.f32 1.0, %v832
    %v834 = vtanh.pop %v825
    %v835 = vmul.f32 %v833, %v745
    %837 = vrot.lane.b32.xlu0 %v834, 64
    %v838 = vpop.permute.xlu0 %837
    %v840 = vmul.f32 %v833, %v838
    %842 = vrot.lane.b32.xlu0 %v840, 32
    %v843 = vpop.permute.xlu0 %842
    %v845 = vadd.f32 %v835, %v843
    %v846 = vtanh.pop %v845
    %848 = vrot.lane.b32.xlu0 %v846, 64
    %v849 = vpop.permute.xlu0 %848
    %v851 = vmul.f32 %v833, %v849
    %v852 = vadd.f32 %v752, %v851
    %854 = vrot.lane.b32.xlu0 %v851, 32
    %v855 = vpop.permute.xlu0 %854
    %v857 = vrot.slane %v138, 4
    %v859 = vsel %vm145, %v855, 0
    %861 = vmatprep.subr.mxu0 0.0
    %862 = vmatpush1.msra.mxu0 0.0
    %863 = vmatprep.subr.mxu0 0.0
    %864 = vmatpush1.msra.mxu0 0.0
    %865 = vmatprep.subr.mxu0 0.0
    %866 = vmatpush1.msra.mxu0 0.0
    %867 = vmatprep.subr.mxu0 0.0
    %868 = vmatpush1.msra.mxu0 0.0
    %869 = vmatprep.subr.mxu0 0.0
    %870 = vmatpush1.msra.mxu0 0.0
    %871 = vmatprep.subr.mxu0 0.0
    %872 = vmatpush1.msra.mxu0 0.0
    %873 = vmatprep.subr.mxu0 0.0
    %874 = vmatpush1.msra.mxu0 0.0
    %875 = vmatprep.subr.mxu0 0.0
    %876 = vmatpush1.msra.mxu0 0.0
    %877 = vmatprep.subr.mxu0 0.0
    %878 = vmatpush1.msra.mxu0 0.0
    %879 = vmatprep.subr.mxu0 0.0
    %880 = vmatpush1.msra.mxu0 0.0
    %881 = vmatprep.subr.mxu0 0.0
    %882 = vmatpush1.msra.mxu0 0.0
    %883 = vmatprep.subr.mxu0 0.0
    %884 = vmatpush1.msra.mxu0 0.0
    %885 = vmatprep.subr.mxu0 0.0
    %886 = vmatpush1.msra.mxu0 %v144
    %887 = vmatprep.subr.mxu0 0.0
    %888 = vmatpush1.msra.mxu0 %v143
    %889 = vmatprep.subr.mxu0 0.0
    %890 = vmatpush1.msra.mxu0 %v142
    %891 = vmatprep.subr.mxu0 0.0
    %892 = vmatpush1.msra.mxu0 %v141
    %893 = vmatprep.subr.mxu0 0.0
    %894 = vmatpush2.msra.mxu0 0.0
    %895 = vmatprep.subr.mxu0 0.0
    %896 = vmatpush2.msra.mxu0 0.0
    %897 = vmatprep.subr.mxu0 0.0
    %898 = vmatpush2.msra.mxu0 0.0
    %899 = vmatprep.subr.mxu0 0.0
    %900 = vmatpush2.msra.mxu0 0.0
    %901 = vmatprep.subr.mxu0 0.0
    %902 = vmatpush2.msra.mxu0 0.0
    %903 = vmatprep.subr.mxu0 0.0
    %904 = vmatpush2.msra.mxu0 0.0
    %905 = vmatprep.subr.mxu0 0.0
    %906 = vmatpush2.msra.mxu0 0.0
    %907 = vmatprep.subr.mxu0 0.0
    %908 = vmatpush2.msra.mxu0 0.0
    %909 = vmatprep.subr.mxu0 0.0
    %910 = vmatpush2.msra.mxu0 0.0
    %911 = vmatprep.subr.mxu0 0.0
    %912 = vmatpush2.msra.mxu0 0.0
    %913 = vmatprep.subr.mxu0 0.0
    %914 = vmatpush2.msra.mxu0 0.0
    %915 = vmatprep.subr.mxu0 0.0
    %916 = vmatpush2.msra.mxu0 0.0
    %917 = vmatprep.subr.mxu0 0.0
    %918 = vmatpush2.msra.mxu0 0.0
    %919 = vmatprep.subr.mxu0 0.0
    %920 = vmatpush2.msra.mxu0 0.0
    %921 = vmatprep.subr.mxu0 0.0
    %922 = vmatpush2.msra.mxu0 0.0
    %923 = vmatprep.subr.mxu0 0.0
    %924 = vmatpush2.msra.mxu0 0.0
    %925 = vmatprep.mubr.f32.mxu0 0.0
    %926 = vmatmul.mubr.f32.gmra.mxu0 %v859
    %v927 = vpop.f32.mrf.mxu0
    %v928 = vadd.f32 %v857, %v927
    %v929 = vpop.f32.mrf.mxu0
    %930 = vdwg.mxu0
    %v931 = vxor.u32 %v928, 2147483648
    %v932 = vmul.f32 %v931, 1.442695
    %v933 = vpow.pop %v932
    %v934 = vadd.f32 %v933, 1.0
    %v935 = vrcp.pop %v934
    %v936 = vmul.f32 1.0, %v935
    %v937 = vtanh.pop %v928
    %v938 = vmul.f32 %v936, %v845
    %940 = vrot.lane.b32.xlu0 %v937, 64
    %v941 = vpop.permute.xlu0 %940
    %v943 = vmul.f32 %v936, %v941
    %945 = vrot.lane.b32.xlu0 %v943, 32
    %v946 = vpop.permute.xlu0 %945
    %v948 = vadd.f32 %v938, %v946
    %v949 = vtanh.pop %v948
    %951 = vrot.lane.b32.xlu0 %v949, 64
    %v952 = vpop.permute.xlu0 %951
    %v954 = vmul.f32 %v936, %v952
    %v955 = vadd.f32 %v852, %v954
    %v956 = vmul.f32 %v955, 0.125
    %v957 = vld [vmem:[%s6] sm:$0xff]
    %v958 = vld [vmem:[%s6 + $0x8] sm:$0xff]
    %v959 = vld [vmem:[%s6 + $0x10] sm:$0xff]
    %v960 = vld [vmem:[%s6 + $0x18] sm:$0xff]
    %v961 = vld [vmem:[%s4] sm:$0xf]
    %v962 = vld [vmem:[%s5] sm:$0xff]
    %v963 = vld [vmem:[%s5 + $0x8] sm:$0xff]
    %v964 = vld [vmem:[%s5 + $0x10] sm:$0xff]
    %v965 = vld [vmem:[%s5 + $0x18] sm:$0xff]
    %v966 = vld [vmem:[%s5 + $0x20] sm:$0xff]
    %v967 = vld [vmem:[%s5 + $0x28] sm:$0xff]
    %v968 = vld [vmem:[%s5 + $0x30] sm:$0xff]
    %v969 = vld [vmem:[%s5 + $0x38] sm:$0xff]
    %v970 = vld [vmem:[%s5 + $0x40] sm:$0xff]
    %v971 = vld [vmem:[%s5 + $0x48] sm:$0xff]
    %v972 = vld [vmem:[%s5 + $0x50] sm:$0xff]
    %v973 = vld [vmem:[%s5 + $0x58] sm:$0xff]
    %v974 = vld [vmem:[%s5 + $0x60] sm:$0xf]
    %vm975 = vcmask 818176
    %v977 = vsel %vm975, %v961, 0
    %vm979 = vcmask 1043456
    %v981 = vsel %vm979, %v974, 0
    %983 = vmatprep.subr.mxu0 0.0
    %984 = vmatpush1.msra.mxu0 0.0
    %985 = vmatprep.subr.mxu0 0.0
    %986 = vmatpush1.msra.mxu0 0.0
    %987 = vmatprep.subr.mxu0 0.0
    %988 = vmatpush1.msra.mxu0 0.0
    %989 = vmatprep.subr.mxu0 0.0
    %990 = vmatpush1.msra.mxu0 %v981
    %991 = vmatprep.subr.mxu0 0.0
    %992 = vmatpush1.msra.mxu0 %v973
    %993 = vmatprep.subr.mxu0 0.0
    %994 = vmatpush1.msra.mxu0 %v972
    %995 = vmatprep.subr.mxu0 0.0
    %996 = vmatpush1.msra.mxu0 %v971
    %997 = vmatprep.subr.mxu0 0.0
    %998 = vmatpush1.msra.mxu0 %v970
    %999 = vmatprep.subr.mxu0 0.0
    %1000 = vmatpush1.msra.mxu0 %v969
    %1001 = vmatprep.subr.mxu0 0.0
    %1002 = vmatpush1.msra.mxu0 %v968
    %1003 = vmatprep.subr.mxu0 0.0
    %1004 = vmatpush1.msra.mxu0 %v967
    %1005 = vmatprep.subr.mxu0 0.0
    %1006 = vmatpush1.msra.mxu0 %v966
    %1007 = vmatprep.subr.mxu0 0.0
    %1008 = vmatpush1.msra.mxu0 %v965
    %1009 = vmatprep.subr.mxu0 0.0
    %1010 = vmatpush1.msra.mxu0 %v964
    %1011 = vmatprep.subr.mxu0 0.0
    %1012 = vmatpush1.msra.mxu0 %v963
    %1013 = vmatprep.subr.mxu0 0.0
    %1014 = vmatpush1.msra.mxu0 %v962
    %1015 = vmatprep.subr.mxu0 0.0
    %1016 = vmatpush2.msra.mxu0 0.0
    %1017 = vmatprep.subr.mxu0 0.0
    %1018 = vmatpush2.msra.mxu0 0.0
    %1019 = vmatprep.subr.mxu0 0.0
    %1020 = vmatpush2.msra.mxu0 0.0
    %1021 = vmatprep.subr.mxu0 0.0
    %1022 = vmatpush2.msra.mxu0 0.0
    %1023 = vmatprep.subr.mxu0 0.0
    %1024 = vmatpush2.msra.mxu0 0.0
    %1025 = vmatprep.subr.mxu0 0.0
    %1026 = vmatpush2.msra.mxu0 0.0
    %1027 = vmatprep.subr.mxu0 0.0
    %1028 = vmatpush2.msra.mxu0 0.0
    %1029 = vmatprep.subr.mxu0 0.0
    %1030 = vmatpush2.msra.mxu0 0.0
    %1031 = vmatprep.subr.mxu0 0.0
    %1032 = vmatpush2.msra.mxu0 0.0
    %1033 = vmatprep.subr.mxu0 0.0
    %1034 = vmatpush2.msra.mxu0 0.0
    %1035 = vmatprep.subr.mxu0 0.0
    %1036 = vmatpush2.msra.mxu0 0.0
    %1037 = vmatprep.subr.mxu0 0.0
    %1038 = vmatpush2.msra.mxu0 0.0
    %1039 = vmatprep.subr.mxu0 0.0
    %1040 = vmatpush2.msra.mxu0 0.0
    %1041 = vmatprep.subr.mxu0 0.0
    %1042 = vmatpush2.msra.mxu0 0.0
    %1043 = vmatprep.subr.mxu0 0.0
    %1044 = vmatpush2.msra.mxu0 0.0
    %1045 = vmatprep.subr.mxu0 0.0
    %1046 = vmatpush2.msra.mxu0 0.0
    %1047 = vmatprep.mubr.f32.mxu0 0.0
    %1048 = vmatmul.mubr.f32.gmra.mxu0 %v977
    %v1049 = vpop.f32.mrf.mxu0
    %v1050 = vadd.f32 0.0, %v1049
    %v1051 = vpop.f32.mrf.mxu0
    %1052 = vdwg.mxu0
    %1054 = vrot.lane.b32.xlu0 %v956, 32
    %v1055 = vpop.permute.xlu0 %1054
    %v1056 = vsel %vm145, %v1055, 0
    %1058 = vmatprep.subr.mxu0 0.0
    %1059 = vmatpush1.msra.mxu0 0.0
    %1060 = vmatprep.subr.mxu0 0.0
    %1061 = vmatpush1.msra.mxu0 0.0
    %1062 = vmatprep.subr.mxu0 0.0
    %1063 = vmatpush1.msra.mxu0 0.0
    %1064 = vmatprep.subr.mxu0 0.0
    %1065 = vmatpush1.msra.mxu0 0.0
    %1066 = vmatprep.subr.mxu0 0.0
    %1067 = vmatpush1.msra.mxu0 0.0
    %1068 = vmatprep.subr.mxu0 0.0
    %1069 = vmatpush1.msra.mxu0 0.0
    %1070 = vmatprep.subr.mxu0 0.0
    %1071 = vmatpush1.msra.mxu0 0.0
    %1072 = vmatprep.subr.mxu0 0.0
    %1073 = vmatpush1.msra.mxu0 0.0
    %1074 = vmatprep.subr.mxu0 0.0
    %1075 = vmatpush1.msra.mxu0 0.0
    %1076 = vmatprep.subr.mxu0 0.0
    %1077 = vmatpush1.msra.mxu0 0.0
    %1078 = vmatprep.subr.mxu0 0.0
    %1079 = vmatpush1.msra.mxu0 0.0
    %1080 = vmatprep.subr.mxu0 0.0
    %1081 = vmatpush1.msra.mxu0 0.0
    %1082 = vmatprep.subr.mxu0 0.0
    %1083 = vmatpush1.msra.mxu0 %v960
    %1084 = vmatprep.subr.mxu0 0.0
    %1085 = vmatpush1.msra.mxu0 %v959
    %1086 = vmatprep.subr.mxu0 0.0
    %1087 = vmatpush1.msra.mxu0 %v958
    %1088 = vmatprep.subr.mxu0 0.0
    %1089 = vmatpush1.msra.mxu0 %v957
    %1090 = vmatprep.subr.mxu0 0.0
    %1091 = vmatpush2.msra.mxu0 0.0
    %1092 = vmatprep.subr.mxu0 0.0
    %1093 = vmatpush2.msra.mxu0 0.0
    %1094 = vmatprep.subr.mxu0 0.0
    %1095 = vmatpush2.msra.mxu0 0.0
    %1096 = vmatprep.subr.mxu0 0.0
    %1097 = vmatpush2.msra.mxu0 0.0
    %1098 = vmatprep.subr.mxu0 0.0
    %1099 = vmatpush2.msra.mxu0 0.0
    %1100 = vmatprep.subr.mxu0 0.0
    %1101 = vmatpush2.msra.mxu0 0.0
    %1102 = vmatprep.subr.mxu0 0.0
    %1103 = vmatpush2.msra.mxu0 0.0
    %1104 = vmatprep.subr.mxu0 0.0
    %1105 = vmatpush2.msra.mxu0 0.0
    %1106 = vmatprep.subr.mxu0 0.0
    %1107 = vmatpush2.msra.mxu0 0.0
    %1108 = vmatprep.subr.mxu0 0.0
    %1109 = vmatpush2.msra.mxu0 0.0
    %1110 = vmatprep.subr.mxu0 0.0
    %1111 = vmatpush2.msra.mxu0 0.0
    %1112 = vmatprep.subr.mxu0 0.0
    %1113 = vmatpush2.msra.mxu0 0.0
    %1114 = vmatprep.subr.mxu0 0.0
    %1115 = vmatpush2.msra.mxu0 0.0
    %1116 = vmatprep.subr.mxu0 0.0
    %1117 = vmatpush2.msra.mxu0 0.0
    %1118 = vmatprep.subr.mxu0 0.0
    %1119 = vmatpush2.msra.mxu0 0.0
    %1120 = vmatprep.subr.mxu0 0.0
    %1121 = vmatpush2.msra.mxu0 0.0
    %1122 = vmatprep.mubr.f32.mxu0 0.0
    %1123 = vmatmul.mubr.f32.gmra.mxu0 %v1056
    %v1124 = vpop.f32.mrf.mxu0
    %v1125 = vadd.f32 %v1050, %v1124
    %v1126 = vpop.f32.mrf.mxu0
    %1127 = vdwg.mxu0
    %v1128 = vld [vmem:[%s7] sm:$0x1]
    %v1130 = vlaneseq
    %v1131 = vshrl.u32 %v1130, 7
    %v1132 = vsub.s32 0, %v1131
    %v1133 = vrot.slane %v1128, %v1132
    %v1135 = vadd.f32 %v1125, %v1133
    %v1136 = vmax.f32 %v1135, 0.0
    %vm1137 = vcmask 60416
    %1138 = vst.msk [vmem:[#allocation2] sm:$0xf] %vm1137, %v1136
    // Predicated region
    $region34: #{tpu_custom_call.1} parent=1 // pred_check
      _
    $region35: #{tpu_custom_call.1} parent=1 // pred_check_branch
      %1140 = sbr.rel (0) target = $region37
    $region36: #{tpu_custom_call.1} parent=1 // pred_region
      %s1142 = ssub.s32 64, 64
      %1143 = vsyncadd [#allocation3], %s1142
      %s1145 = sshll.u32 [#allocation2], 4
      %s1146 = int_to_ptr.vmem [resolvable:$true] %s1145
      %1148 = dma.vmem_to_hbm [thread:$0]  %s1146, 64, %s8, [#allocation3]
    $region37: #{tpu_custom_call.1} parent=1 // pred_fallthru
      _
    // Predicated region
    $region38: #{tpu_custom_call.1} parent=1 // pred_check
      _
    $region39: #{tpu_custom_call.1} parent=1 // pred_check_branch
      %1150 = sbr.rel (0) target = $region41
    $region40: #{tpu_custom_call.1} parent=1 // pred_region
      %1151 = dma.done [#allocation3], 64
    $region41: #{tpu_custom_call.1} parent=1 // pred_fallthru
      _
    %1152 = vsyncpa [#allocation3], 1

</llo_original>
